<compile_context>
chip_gen: v6e
topology: v6e:2x2x1
jax: 0.10.0
libtpu: 0.0.40
codegen_flags: <defaults>
</compile_context>

<pallas_src>
import functools

import jax
import jax.numpy as jnp
from jax.experimental import pallas as pl
from jax.experimental.pallas import tpu as pltpu

_LANE = 128


def _round_up(x: int, m: int) -> int:
    return ((x + m - 1) // m) * m


def _round_down(x: int, m: int) -> int:
    return max(m, (x // m) * m)


def _divisor_tile(dim: int, tile: int, align: int) -> int:
    """Largest multiple of `align` dividing `dim` and <= `tile` (if not too small).

    Avoids wrapper-side jnp.pad (an extra HBM pass) for already-aligned dims.
    """
    if dim <= tile or dim % align != 0:
        return tile
    best = None
    d = align
    while d <= tile:
        if dim % d == 0:
            best = d
        d += align
    if best is not None and best * 4 >= tile:
        return best
    return tile


@functools.lru_cache(maxsize=1)
def _vmem_budget_bytes() -> int:
    """Generation-aware VMEM budget (~3/4 of physical per-core VMEM)."""
    phys = 64 * 1024 * 1024  # conservative fallback (v7x per-core VMEM)
    try:
        phys = int(pltpu.get_tpu_info().vmem_capacity_bytes)
    except Exception:
        pass
    return min((phys * 3) // 4, 100 * 1024 * 1024)


def _mlp_block_kernel_inplace(x_ref, w_ref, b_ref, o_ref):
    """f32 output: accumulate directly into the VMEM-resident output block."""
    k = pl.program_id(2)

    @pl.when(k == 0)
    def _init():
        # Fold the bias into the accumulator init (one broadcast per tile).
        o_ref[...] = jnp.broadcast_to(b_ref[...], o_ref.shape)

    o_ref[...] += jnp.dot(
        x_ref[...], w_ref[...], preferred_element_type=jnp.float32
    )

    @pl.when(k == pl.num_programs(2) - 1)
    def _finalize():
        # tanh epilogue (EUP slot, essentially free next to the MXU).
        o_ref[...] = jnp.tanh(o_ref[...])


def _mlp_block_kernel_scratch(x_ref, w_ref, b_ref, o_ref, acc_ref):
    """Non-f32 output: f32 VMEM accumulator, cast on the final store."""
    k = pl.program_id(2)

    @pl.when(k == 0)
    def _init():
        acc_ref[...] = jnp.broadcast_to(b_ref[...], acc_ref.shape)

    acc_ref[...] += jnp.dot(
        x_ref[...], w_ref[...], preferred_element_type=jnp.float32
    )

    @pl.when(k == pl.num_programs(2) - 1)
    def _finalize():
        o_ref[...] = jnp.tanh(acc_ref[...]).astype(o_ref.dtype)


@functools.partial(
    jax.jit, static_argnames=("tm", "tn", "tk", "compute_dtype", "w_buffers")
)
def mlp_block(x, w, b, *, tm=512, tn=512, tk=None,
              compute_dtype=jnp.bfloat16, w_buffers=2):
    """Pallas equivalent of MlpBlock.forward: tanh(x @ w + b).

    x: (..., input_dim)
    w: (input_dim, output_dim)      (== PyTorch linear.weight.T)
    b: (output_dim,) or (1, output_dim)
    compute_dtype: MXU operand dtype (default bf16; f32 accumulation always).
        Pass jnp.float32 for exact parity; fp8 dtypes are possible on v7x.
    w_buffers: pipeline depth for the W stream (3 can help on v5e).
    """
    out_dtype = x.dtype
    lead_shape = x.shape[:-1]
    K = x.shape[-1]
    N = w.shape[-1]

    cdt = jnp.dtype(compute_dtype if compute_dtype is not None else x.dtype)
    in_bytes = cdt.itemsize
    out_bytes = jnp.dtype(out_dtype).itemsize
    sub = 32 // in_bytes            # sublane packing: 8 (f32), 16 (bf16), 32 (fp8)

    # Flatten all leading dims into one M axis: many "MLP calls" == one matmul.
    x2 = x.reshape(-1, K).astype(cdt)
    w = w.astype(cdt)   # NOTE: in production, pre-cast/pre-pad W once at init.
    b2 = b.reshape(1, N).astype(jnp.float32)
    M = x2.shape[0]

    if tk is None:
        tk = 2048 if in_bytes <= 2 else 1024

    # 1) Round user tiles to hardware alignment; 2) clamp to the problem size.
    tm = min(_round_up(tm, sub), _round_up(M, sub))
    tn = min(_round_up(tn, _LANE), _round_up(N, _LANE))
    tk = min(_round_up(tk, _LANE), _round_up(K, _LANE))

    # 3) Snap tiles to divisors of already-aligned dims (skip jnp.pad of x/W).
    tm = _divisor_tile(M, tm, sub)
    tn = _divisor_tile(N, tn, _LANE)
    tk = _divisor_tile(K, tk, _LANE)

    # 4) Megacore: ensure at least one parallel axis has >= 2 blocks so a v7x
    #    chip doesn't leave a TensorCore idle on skinny-batch shapes.
    if _round_up(M, sub) <= tm and _round_up(N, _LANE) <= tn:
        if _round_up(N, _LANE) >= 2 * _LANE:
            tn = _round_down(_round_up(N, _LANE) // 2, _LANE)
        elif _round_up(M, sub) >= 2 * sub:
            tm = _round_down(_round_up(M, sub) // 2, sub)

    # 5) Shrink tiles until the double-buffered working set fits the VMEM
    #    budget of this TPU generation (v7x: 64 MiB, v5e/v6e: 128 MiB).
    use_scratch = jnp.dtype(out_dtype) != jnp.dtype(jnp.float32)
    vmem_budget = _vmem_budget_bytes()

    def working_set(tm_, tn_, tk_):
        ws = (2 * tm_ * tk_ * in_bytes        # x tiles (double-buffered)
              + 2 * tk_ * tn_ * in_bytes      # W tiles (double-buffered)
              + 2 * tn_ * 4                   # bias tiles
              + 2 * tm_ * tn_ * out_bytes)    # output tiles
        if use_scratch:
            ws += tm_ * tn_ * 4               # f32 accumulator scratch
        return ws

    while working_set(tm, tn, tk) > int(vmem_budget * 0.9):
        if tk > _LANE:
            tk = _round_down(tk // 2, _LANE)
        elif tn > _LANE:
            tn = _round_down(tn // 2, _LANE)
        elif tm > sub:
            tm = _round_down(tm // 2, sub)
        else:
            break

    # 6) Pad to tile multiples -> every block is (8,128)-aligned, every store
    #    is a lane-dense unmasked vst, and zero-padded K contributes nothing.
    Mp, Np, Kp = _round_up(M, tm), _round_up(N, tn), _round_up(K, tk)
    if Mp != M or Kp != K:
        x2 = jnp.pad(x2, ((0, Mp - M), (0, Kp - K)))
    if Kp != K or Np != N:
        w = jnp.pad(w, ((0, Kp - K), (0, Np - N)))
    if Np != N:
        b2 = jnp.pad(b2, ((0, 0), (0, Np - N)))

    grid = (Mp // tm, Np // tn, Kp // tk)

    w_spec_kwargs = {}
    if w_buffers != 2:
        # e.g. w_buffers=3 on v5e if the W DMA is exposed (low HBM BW).
        w_spec_kwargs["pipeline_mode"] = pl.Buffered(w_buffers)

    kernel = _mlp_block_kernel_scratch if use_scratch else _mlp_block_kernel_inplace
    scratch_shapes = [pltpu.VMEM((tm, tn), jnp.float32)] if use_scratch else []

    cost = pl.CostEstimate(
        flops=2 * Mp * Np * Kp,
        transcendentals=Mp * Np,
        bytes_accessed=(Mp * Kp * in_bytes + Kp * Np * in_bytes
                        + Np * 4 + Mp * Np * out_bytes),
    )

    out_p = pl.pallas_call(
        kernel,
        out_shape=jax.ShapeDtypeStruct((Mp, Np), out_dtype),
        grid=grid,
        in_specs=[
            pl.BlockSpec((tm, tk), lambda i, j, k: (i, k)),                   # x
            pl.BlockSpec((tk, tn), lambda i, j, k: (k, j), **w_spec_kwargs),  # W
            pl.BlockSpec((1, tn), lambda i, j, k: (0, j)),                    # bias
        ],
        out_specs=pl.BlockSpec((tm, tn), lambda i, j, k: (i, j)),
        scratch_shapes=scratch_shapes,
        compiler_params=pltpu.CompilerParams(
            # M/N tiles are independent (megacore-shardable); K is serial.
            dimension_semantics=("parallel", "parallel", "arbitrary"),
            vmem_limit_bytes=vmem_budget,
        ),
        cost_estimate=cost,
    )(x2, w, b2)

    return out_p[:M, :N].reshape(*lead_shape, N)


if __name__ == "__main__":
    key = jax.random.PRNGKey(0)
    kx, kw, kb, kx2, kw2, kb2 = jax.random.split(key, 6)

    def reference(x, w, b, cdt):
        # Reference with the same input quantization as the kernel's compute
        # dtype, accumulated in f32 at highest matmul precision.
        xq = x.astype(cdt).astype(jnp.float32)
        wq = w.astype(cdt).astype(jnp.float32)
        return jnp.tanh(jnp.matmul(xq, wq, precision="highest")
                        + b.reshape(1, -1).astype(jnp.float32))

    # --- 1) Small MlpBlock shape (batch=8, input_dim=16, output_dim=32),
    #        default bf16 compute path.
    batch, input_dim, output_dim = 8, 16, 32
    bound = 1.0 / float(input_dim) ** 0.5
    x = jax.random.normal(kx, (batch, input_dim), dtype=jnp.float32)
    w = jax.random.uniform(kw, (input_dim, output_dim), jnp.float32, -bound, bound)
    b = jax.random.uniform(kb, (output_dim,), jnp.float32, -bound, bound)
    out = jax.block_until_ready(mlp_block(x, w, b))
    ref1 = reference(x, w, b, jnp.bfloat16)
    assert out.shape == (batch, output_dim)
    assert out.dtype == jnp.float32
    assert jnp.allclose(out, ref1, atol=1e-2, rtol=1e-2)

    # --- 2) Larger shape with default (large) tiles: exercises the megacore
    #        N-split (>=2 parallel blocks) and M padding.
    M2, K2, N2 = 200, 384, 512
    x2 = jax.random.normal(kx2, (M2, K2), dtype=jnp.float32)
    w2 = jax.random.uniform(kw2, (K2, N2), jnp.float32, -0.1, 0.1)
    b2 = jax.random.uniform(kb2, (N2,), jnp.float32, -0.1, 0.1)
    ref2_bf16 = reference(x2, w2, b2, jnp.bfloat16)
    out2 = jax.block_until_ready(mlp_block(x2, w2, b2))
    assert out2.shape == (M2, N2)
    assert jnp.allclose(out2, ref2_bf16, atol=1e-2, rtol=1e-2)

    # --- 3) Same problem with explicit small tiles: full 3-D grid with a real
    #        K reduction (grid = (2, 4, 3)), still bf16 compute.
    out3 = jax.block_until_ready(mlp_block(x2, w2, b2, tm=128, tn=128, tk=128))
    assert jnp.allclose(out3, ref2_bf16, atol=1e-2, rtol=1e-2)

    # --- 4) f32 parity mode (opt-in), tight tolerance.
    ref2_f32 = reference(x2, w2, b2, jnp.float32)
    out4 = jax.block_until_ready(
        mlp_block(x2, w2, b2, tm=128, tn=128, tk=128, compute_dtype=jnp.float32))
    assert jnp.allclose(out4, ref2_f32, atol=1e-4, rtol=1e-4)

    # --- 5) bf16 inputs/outputs: exercises the f32-scratch accumulator path.
    out5 = jax.block_until_ready(mlp_block(x.astype(jnp.bfloat16), w, b))
    assert out5.dtype == jnp.bfloat16
    assert jnp.allclose(out5.astype(jnp.float32), ref1, atol=2e-2, rtol=2e-2)

    print("KERNEL_OK")
</pallas_src>

<mosaic_0001>
module attributes {stable_mosaic.version = 11 : i64} {
  func.func @_mlp_block_kernel_inplace(%arg0: i32, %arg1: i32, %arg2: i32, %arg3: memref<16x128xbf16, #tpu.memory_space<vmem>>, %arg4: memref<128x128xbf16, #tpu.memory_space<vmem>>, %arg5: memref<1x128xf32, #tpu.memory_space<vmem>>, %arg6: memref<16x128xf32, #tpu.memory_space<vmem>>) attributes {dimension_semantics = [#tpu.dimension_semantics<parallel>, #tpu.dimension_semantics<parallel>, #tpu.dimension_semantics<arbitrary>], iteration_bounds = array<i64: 1, 1, 1>, scalar_prefetch = 0 : i64, scratch_operands = 0 : i64, tpu.core_type = #tpu.core_type<tc>, window_params = [{transform_indices = @transform_0, window_bounds = array<i64: 16, 128>}, {transform_indices = @transform_1, window_bounds = array<i64: 128, 128>}, {transform_indices = @transform_2, window_bounds = array<i64: 1, 128>}, {transform_indices = @transform_3, window_bounds = array<i64: 16, 128>}]} {
    %c0_i32 = arith.constant 0 : i32
    %0 = arith.cmpi eq, %arg2, %c0_i32 : i32
    %1 = arith.extui %0 : i1 to i32
    %c0_i32_0 = arith.constant 0 : i32
    %2 = arith.cmpi ne, %1, %c0_i32_0 : i32
    scf.if %2 {
      %c0_10 = arith.constant 0 : index
      %c0_11 = arith.constant 0 : index
      %12 = vector.load %arg5[%c0_10, %c0_11] : memref<1x128xf32, #tpu.memory_space<vmem>>, vector<1x128xf32>
      %13 = vector.shape_cast %12 : vector<1x128xf32> to vector<1x128xf32>
      %14 = vector.broadcast %13 : vector<1x128xf32> to vector<16x128xf32>
      %c0_12 = arith.constant 0 : index
      %c0_13 = arith.constant 0 : index
      %15 = vector.load %arg6[%c0_12, %c0_13] : memref<16x128xf32, #tpu.memory_space<vmem>>, vector<16x128xf32>
      tpu.vector_store %arg6[%c0_12, %c0_13], %14 {strides = array<i32>} : memref<16x128xf32, #tpu.memory_space<vmem>>, vector<16x128xf32>,
    } else {
    }
    %c0 = arith.constant 0 : index
    %c0_1 = arith.constant 0 : index
    %3 = vector.load %arg6[%c0, %c0_1] : memref<16x128xf32, #tpu.memory_space<vmem>>, vector<16x128xf32>
    %c0_2 = arith.constant 0 : index
    %c0_3 = arith.constant 0 : index
    %4 = vector.load %arg3[%c0_2, %c0_3] : memref<16x128xbf16, #tpu.memory_space<vmem>>, vector<16x128xbf16>
    %c0_4 = arith.constant 0 : index
    %c0_5 = arith.constant 0 : index
    %5 = vector.load %arg4[%c0_4, %c0_5] : memref<128x128xbf16, #tpu.memory_space<vmem>>, vector<128x128xbf16>
    %cst = arith.constant dense<0.000000e+00> : vector<16x128xf32>
    %6 = tpu.matmul %4, %5, %cst {dimension_numbers = #tpu.dot_dimension_numbers<[1], [0], [0], [1], [0, 0, 1, 1], [], []>} : vector<16x128xbf16>, vector<128x128xbf16>, vector<16x128xf32> -> vector<16x128xf32>
    %7 = arith.addf %3, %6 : vector<16x128xf32>
    %c0_6 = arith.constant 0 : index
    %c0_7 = arith.constant 0 : index
    %8 = vector.load %arg6[%c0_6, %c0_7] : memref<16x128xf32, #tpu.memory_space<vmem>>, vector<16x128xf32>
    tpu.vector_store %arg6[%c0_6, %c0_7], %7 {strides = array<i32>} : memref<16x128xf32, #tpu.memory_space<vmem>>, vector<16x128xf32>,
    %c0_i32_8 = arith.constant 0 : i32
    %9 = arith.cmpi eq, %arg2, %c0_i32_8 : i32
    %10 = arith.extui %9 : i1 to i32
    %c0_i32_9 = arith.constant 0 : i32
    %11 = arith.cmpi ne, %10, %c0_i32_9 : i32
    scf.if %11 {
      %c0_10 = arith.constant 0 : index
      %c0_11 = arith.constant 0 : index
      %12 = vector.load %arg6[%c0_10, %c0_11] : memref<16x128xf32, #tpu.memory_space<vmem>>, vector<16x128xf32>
      %13 = math.tanh %12 : vector<16x128xf32>
      %c0_12 = arith.constant 0 : index
      %c0_13 = arith.constant 0 : index
      %14 = vector.load %arg6[%c0_12, %c0_13] : memref<16x128xf32, #tpu.memory_space<vmem>>, vector<16x128xf32>
      tpu.vector_store %arg6[%c0_12, %c0_13], %13 {strides = array<i32>} : memref<16x128xf32, #tpu.memory_space<vmem>>, vector<16x128xf32>,
    } else {
    }
    return
  }
  func.func @transform_0(%arg0: i32, %arg1: i32, %arg2: i32) -> (i32, i32) {
    %c0_i32 = arith.constant 0 : i32
    return %arg0, %arg2 : i32, i32
  }
  func.func @transform_1(%arg0: i32, %arg1: i32, %arg2: i32) -> (i32, i32) {
    %c0_i32 = arith.constant 0 : i32
    return %arg2, %arg1 : i32, i32
  }
  func.func @transform_2(%arg0: i32, %arg1: i32, %arg2: i32) -> (i32, i32) {
    %c0_i32 = arith.constant 0 : i32
    %c0_i32_0 = arith.constant 0 : i32
    return %c0_i32, %arg1 : i32, i32
  }
  func.func @transform_3(%arg0: i32, %arg1: i32, %arg2: i32) -> (i32, i32) {
    %c0_i32 = arith.constant 0 : i32
    return %arg0, %arg1 : i32, i32
  }
}

</mosaic_0001>

<llo_original>
// kernel: mlp_block.1
$region0: #{mlp_block.1}
  #allocation0 [shape = 'u32[]', space=smem, size = 0x4, offset = 0x4, fixed_abs, tag = 'smem constant byte address 0x4 - core index']
  #allocation1 [shape = 'u32[144,128]{1,0:T(1,128)}', space=vmem, size = 0x12000, scoped, tag = 'internal scratch']
  %s0 = inlined_call_operand.vmem [shape: bf16[16,128], index: 0, kind: input, shape index: {}]
  %s1 = inlined_call_operand.vmem [shape: bf16[128,128], index: 1, kind: input, shape index: {}]
  %s2 = inlined_call_operand.vmem [shape: f32[1,128], index: 2, kind: input, shape index: {}]
  %s3 = inlined_call_operand.vmem [shape: f32[16,128], index: 3, kind: output, shape index: {}]
  %s4 = sld [smem:[#allocation0]]
  $region30: #{mlp_block.1} parent=0
    _
  %s6 = ssub.s32 1, %s4
  %s7 = scalar_select 0, %s6, %s4
  // Predicated region
  $region2: #{mlp_block.1} parent=0 // pred_check
    _
  $region3: #{mlp_block.1} parent=0 // pred_check_branch
    %9 = sbr.rel (0) target = $region5
  $region4: #{mlp_block.1} parent=0 // pred_region
    _
  $region5: #{mlp_block.1} parent=0 // pred_fallthru
    _
  // Predicated region
  $region6: #{mlp_block.1} parent=0 // pred_check
    _
  $region7: #{mlp_block.1} parent=0 // pred_check_branch
    %11 = sbr.rel (0) target = $region9
  $region8: #{mlp_block.1} parent=0 // pred_region
    _
  $region9: #{mlp_block.1} parent=0 // pred_fallthru
    _
  // Predicated region
  $region10: #{mlp_block.1} parent=0 // pred_check
    _
  $region11: #{mlp_block.1} parent=0 // pred_check_branch
    %13 = sbr.rel (0) target = $region13
  $region12: #{mlp_block.1} parent=0 // pred_region
    _
  $region13: #{mlp_block.1} parent=0 // pred_fallthru
    _
  %p15 = scmp.eq.s32.totalorder 0, 0
  // Predicated region
  $region14: #{mlp_block.1} parent=0 // pred_check
    %p16 = pneg %p15
  $region15: #{mlp_block.1} parent=0 // pred_check_branch
    %18 = sbr.rel (%p16) target = $region17
  $region16: #{mlp_block.1} parent=0 // pred_region
    %v19 = vld [vmem:[%s2] sm:$0x1]
    %v21 = vlaneseq
    %v22 = vshrl.u32 %v21, 7
    %v23 = vsub.s32 0, %v22
    %v24 = vrot.slane %v19, %v23
    %26 = vst [vmem:[%s3] sm:$0xff] %v24
    %27 = vst [vmem:[%s3 + $0x8] sm:$0xff] %v24
  $region17: #{mlp_block.1} parent=0 // pred_fallthru
    _
  %v28 = vld [vmem:[%s3] sm:$0xff]
  %v29 = vld [vmem:[%s3 + $0x8] sm:$0xff]
  %v30 = vld [vmem:[%s0] sm:$0xf]
  %v31 = vld [vmem:[%s0 + $0x4] sm:$0xf]
  %v32 = vld [vmem:[%s1] sm:$0xf]
  %v33 = vld [vmem:[%s1 + $0x4] sm:$0xf]
  %v34 = vld [vmem:[%s1 + $0x8] sm:$0xf]
  %v35 = vld [vmem:[%s1 + $0xc] sm:$0xf]
  %v36 = vld [vmem:[%s1 + $0x10] sm:$0xf]
  %v37 = vld [vmem:[%s1 + $0x14] sm:$0xf]
  %v38 = vld [vmem:[%s1 + $0x18] sm:$0xf]
  %v39 = vld [vmem:[%s1 + $0x1c] sm:$0xf]
  %v40 = vld [vmem:[%s1 + $0x20] sm:$0xf]
  %v41 = vld [vmem:[%s1 + $0x24] sm:$0xf]
  %v42 = vld [vmem:[%s1 + $0x28] sm:$0xf]
  %v43 = vld [vmem:[%s1 + $0x2c] sm:$0xf]
  %v44 = vld [vmem:[%s1 + $0x30] sm:$0xf]
  %v45 = vld [vmem:[%s1 + $0x34] sm:$0xf]
  %v46 = vld [vmem:[%s1 + $0x38] sm:$0xf]
  %v47 = vld [vmem:[%s1 + $0x3c] sm:$0xf]
  %v50 = vunpack.c.l.b16 %v30
  %v51 = vunpack.c.l.b16 %v31
  %v52 = vpack.c.b16 %v51, %v50
  %v70 = vunpack.c.l.b16 %v32
  %v71 = vunpack.c.l.b16 %v33
  %v72 = vunpack.c.l.b16 %v34
  %v73 = vunpack.c.l.b16 %v35
  %v74 = vunpack.c.l.b16 %v36
  %v75 = vunpack.c.l.b16 %v37
  %v76 = vunpack.c.l.b16 %v38
  %v77 = vunpack.c.l.b16 %v39
  %v78 = vunpack.c.l.b16 %v40
  %v79 = vunpack.c.l.b16 %v41
  %v80 = vunpack.c.l.b16 %v42
  %v81 = vunpack.c.l.b16 %v43
  %v82 = vunpack.c.l.b16 %v44
  %v83 = vunpack.c.l.b16 %v45
  %v84 = vunpack.c.l.b16 %v46
  %v85 = vunpack.c.l.b16 %v47
  %v86 = vpack.c.b16 %v71, %v70
  %v87 = vpack.c.b16 %v73, %v72
  %v88 = vpack.c.b16 %v75, %v74
  %v89 = vpack.c.b16 %v77, %v76
  %v90 = vpack.c.b16 %v79, %v78
  %v91 = vpack.c.b16 %v81, %v80
  %v92 = vpack.c.b16 %v83, %v82
  %v93 = vpack.c.b16 %v85, %v84
  %102 = vmatprep.subr.bf16.mxu0 0
  %103 = vmatpush1.bf16.msra.mxu0 %v93
  %104 = vmatprep.subr.bf16.mxu0 0
  %105 = vmatpush1.bf16.msra.mxu0 %v92
  %106 = vmatprep.subr.bf16.mxu0 0
  %107 = vmatpush1.bf16.msra.mxu0 %v91
  %108 = vmatprep.subr.bf16.mxu0 0
  %109 = vmatpush1.bf16.msra.mxu0 %v90
  %110 = vmatprep.subr.bf16.mxu0 0
  %111 = vmatpush1.bf16.msra.mxu0 %v89
  %112 = vmatprep.subr.bf16.mxu0 0
  %113 = vmatpush1.bf16.msra.mxu0 %v88
  %114 = vmatprep.subr.bf16.mxu0 0
  %115 = vmatpush1.bf16.msra.mxu0 %v87
  %116 = vmatprep.subr.bf16.mxu0 0
  %117 = vmatpush1.bf16.msra.mxu0 %v86
  %118 = vmatprep.subr.bf16.mxu0 0
  %119 = vmatpush2.bf16.msra.mxu0 0
  %120 = vmatprep.subr.bf16.mxu0 0
  %121 = vmatpush2.bf16.msra.mxu0 0
  %122 = vmatprep.subr.bf16.mxu0 0
  %123 = vmatpush2.bf16.msra.mxu0 0
  %124 = vmatprep.subr.bf16.mxu0 0
  %125 = vmatpush2.bf16.msra.mxu0 0
  %126 = vmatprep.subr.bf16.mxu0 0
  %127 = vmatpush2.bf16.msra.mxu0 0
  %128 = vmatprep.subr.bf16.mxu0 0
  %129 = vmatpush2.bf16.msra.mxu0 0
  %130 = vmatprep.subr.bf16.mxu0 0
  %131 = vmatpush2.bf16.msra.mxu0 0
  %132 = vmatprep.subr.bf16.mxu0 0
  %133 = vmatpush2.bf16.msra.mxu0 0
  %134 = vmatprep.mubr.bf16.mxu0 0
  %135 = vmatmul.mubr.bf16.gmra.mxu0 %v52
  %v136 = vpop.f32.mrf.mxu0
  %v137 = vadd.f32 0.0, %v136
  %v138 = vpop.f32.mrf.mxu0
  %v139 = vpop.f32.mrf.mxu0
  %v140 = vadd.f32 0.0, %v139
  %v141 = vpop.f32.mrf.mxu0
  %142 = vdwg.mxu0
  %v143 = vadd.f32 %v28, %v137
  %v144 = vadd.f32 %v29, %v140
  %145 = vst [vmem:[%s3] sm:$0xff] %v143
  %146 = vst [vmem:[%s3 + $0x8] sm:$0xff] %v144
  // Predicated region
  $region18: #{mlp_block.1} parent=0 // pred_check
    %p147 = pneg %p15
  $region19: #{mlp_block.1} parent=0 // pred_check_branch
    %149 = sbr.rel (%p147) target = $region21
  $region20: #{mlp_block.1} parent=0 // pred_region
    %v150 = vld [vmem:[%s3] sm:$0xff]
    %v151 = vld [vmem:[%s3 + $0x8] sm:$0xff]
    %v152 = vtanh.pop %v150
    %v153 = vtanh.pop %v151
    %154 = vst [vmem:[%s3] sm:$0xff] %v152
    %155 = vst [vmem:[%s3 + $0x8] sm:$0xff] %v153
  $region21: #{mlp_block.1} parent=0 // pred_fallthru
    _
  // Predicated region
  $region22: #{mlp_block.1} parent=0 // pred_check
    _
  $region23: #{mlp_block.1} parent=0 // pred_check_branch
    %157 = sbr.rel (0) target = $region25
  $region24: #{mlp_block.1} parent=0 // pred_region
    _
  $region25: #{mlp_block.1} parent=0 // pred_fallthru
    _
  // Predicated region
  $region26: #{mlp_block.1} parent=0 // pred_check
    _
  $region27: #{mlp_block.1} parent=0 // pred_check_branch
    %159 = sbr.rel (0) target = $region29
  $region28: #{mlp_block.1} parent=0 // pred_region
    _
  $region29: #{mlp_block.1} parent=0 // pred_fallthru
    _

</llo_original>
